<compile_context>
chip_gen: v7x
topology: tpu7x:2x2x1
jax: 0.10.0
libtpu: 0.0.40
codegen_flags: <defaults>
</compile_context>

<pallas_src>
import jax
import jax.numpy as jnp
from jax.experimental import pallas as pl
from jax.experimental.pallas import tpu as pltpu


def _fused_unet_block(x_flat, w1_mat, b1, w2_mat, b2, masks, *, W, out_dtype):
    """x_flat: (N, Cin, H*W) -> (N, Cout, H*W).  Both convs in one kernel."""
    N, Cin, S = x_flat.shape
    Cout = w1_mat.shape[0]
    PADF = 2 * W           # flat zero pad per side; covers |tap offset| <= W + 1
    SB = S + 2 * PADF      # padded flat length

    def kernel(x_ref, w1_ref, b1_ref, w2_ref, b2_ref, m_ref, o_ref,
               pad1_ref, pad2_ref):
        m = m_ref[...]
        mask_l = m[0:1, :]   # zeros where output column x == 0     (dx == 0 taps)
        mask_r = m[1:2, :]   # zeros where output column x == W - 1 (dx == 2 taps)

        def conv3x3_relu(pad_ref, w_mat, bias):
            # pad_ref: (C, SB) zero-padded flat activation, image at [PADF, PADF+S).
            taps = []
            for dy in range(3):
                for dx in range(3):
                    off = (dy - 1) * W + (dx - 1)
                    patch = pad_ref[:, PADF + off:PADF + off + S]   # (C, S)
                    if dx == 0:
                        patch = patch * mask_l
                    elif dx == 2:
                        patch = patch * mask_r
                    taps.append(patch)
            patches = jnp.concatenate(taps, axis=0)                 # (9*C, S)
            y = jnp.dot(w_mat, patches,                             # (Cout, S)
                        preferred_element_type=jnp.float32)
            return jnp.maximum(y + bias, 0.0)                       # bias: (Cout, 1)

        # ---- conv1: in-kernel zero padding of the input (no jnp.pad in HBM) ----
        pad1_ref[...] = jnp.zeros_like(pad1_ref)
        pad1_ref[:, PADF:PADF + S] = x_ref[0].astype(jnp.float32)
        h = conv3x3_relu(pad1_ref, w1_ref[...], b1_ref[...])

        # ---- conv2: intermediate stays in VMEM scratch (no HBM round trip) ----
        pad2_ref[...] = jnp.zeros_like(pad2_ref)
        pad2_ref[:, PADF:PADF + S] = h
        y = conv3x3_relu(pad2_ref, w2_ref[...], b2_ref[...])

        o_ref[0] = y.astype(o_ref.dtype)                            # lane-dense store

    return pl.pallas_call(
        kernel,
        out_shape=jax.ShapeDtypeStruct((N, Cout, S), out_dtype),
        grid_spec=pltpu.PrefetchScalarGridSpec(
            num_scalar_prefetch=0,
            grid=(N,),
            in_specs=[
                pl.BlockSpec((1, Cin, S), lambda n: (n, 0, 0)),
                pl.BlockSpec((Cout, 9 * Cin), lambda n: (0, 0)),
                pl.BlockSpec((Cout, 1), lambda n: (0, 0)),
                pl.BlockSpec((Cout, 9 * Cout), lambda n: (0, 0)),
                pl.BlockSpec((Cout, 1), lambda n: (0, 0)),
                pl.BlockSpec((2, S), lambda n: (0, 0)),
            ],
            out_specs=pl.BlockSpec((1, Cout, S), lambda n: (n, 0, 0)),
            scratch_shapes=[
                pltpu.VMEM((Cin, SB), jnp.float32),   # padded input (flat)
                pltpu.VMEM((Cout, SB), jnp.float32),  # padded intermediate (flat)
            ],
        ),
        compiler_params=pltpu.CompilerParams(
            dimension_semantics=("parallel",),
            vmem_limit_bytes=32 * 1024 * 1024,
        ),
    )(x_flat, w1_mat, b1, w2_mat, b2, masks)


def init_unet_block_params(key, in_ch, out_ch, dtype=jnp.float32):
    """Deterministic synthetic parameters (PyTorch-like uniform fan-in init)."""
    k1, k2, k3, k4 = jax.random.split(key, 4)
    bound1 = 1.0 / jnp.sqrt(in_ch * 3.0 * 3.0)
    bound2 = 1.0 / jnp.sqrt(out_ch * 3.0 * 3.0)
    # Weights stored HWIO (kh, kw, cin, cout).
    w1 = jax.random.uniform(k1, (3, 3, in_ch, out_ch), dtype, -bound1, bound1)
    b1 = jax.random.uniform(k2, (out_ch,), dtype, -bound1, bound1)
    w2 = jax.random.uniform(k3, (3, 3, out_ch, out_ch), dtype, -bound2, bound2)
    b2 = jax.random.uniform(k4, (out_ch,), dtype, -bound2, bound2)
    return {"w1": w1, "b1": b1, "w2": w2, "b2": b2}


def unet_block_apply(x_nchw, params):
    """Forward pass of UNetBlock.  Input/output are NCHW like the PyTorch module."""
    N, Cin, H, W = x_nchw.shape
    Cout = params["w1"].shape[-1]
    S = H * W

    # Free contiguous reshape: channels on sublanes, flat spatial on lanes.
    x_flat = x_nchw.reshape(N, Cin, S)

    # im2col weight matrices; patch-matrix row order is k = (dy*3+dx)*C + c,
    # which is exactly HWIO.reshape(9*C, Cout) row order.
    w1_mat = params["w1"].reshape(9 * Cin, Cout).T            # (Cout, 9*Cin)
    w2_mat = params["w2"].reshape(9 * Cout, Cout).T           # (Cout, 9*Cout)
    b1 = params["b1"].reshape(Cout, 1)
    b2 = params["b2"].reshape(Cout, 1)

    # Column-edge masks: flat-shift taps with dx=0/dx=2 must not pull pixels
    # from the horizontally adjacent image row.
    col = jnp.arange(S, dtype=jnp.int32) % W
    masks = jnp.stack([(col != 0), (col != W - 1)]).astype(jnp.float32)  # (2, S)

    out_flat = _fused_unet_block(x_flat, w1_mat, b1, w2_mat, b2, masks,
                                 W=W, out_dtype=x_nchw.dtype)
    return out_flat.reshape(N, Cout, H, W)


unet_block_forward = jax.jit(unet_block_apply)


if __name__ == "__main__":
    key = jax.random.PRNGKey(0)
    kx, kp = jax.random.split(key)

    N, in_ch, out_ch, H, W = 2, 4, 8, 16, 16
    x = jax.random.normal(kx, (N, in_ch, H, W), jnp.float32)
    params = init_unet_block_params(kp, in_ch, out_ch)

    out = unet_block_forward(x, params)
    out = jax.block_until_ready(out)

    # Reference check against XLA's conv to confirm semantics.
    def ref(x_nchw, p):
        def conv(xi, w, b):
            y = jax.lax.conv_general_dilated(
                xi, w, window_strides=(1, 1), padding="SAME",
                dimension_numbers=("NCHW", "HWIO", "NCHW"))
            return jax.nn.relu(y + b[None, :, None, None])
        y = conv(x_nchw, p["w1"], p["b1"])
        return conv(y, p["w2"], p["b2"])

    expected = ref(x, params)
    assert out.shape == (N, out_ch, H, W)
    assert jnp.allclose(out, expected, atol=1e-4, rtol=1e-4), float(
        jnp.max(jnp.abs(out - expected)))

    print("KERNEL_OK")
</pallas_src>

<mosaic_0001>
module attributes {stable_mosaic.version = 11 : i64} {
  func.func @kernel(%arg0: i32, %arg1: memref<1x4x256xf32, #tpu.memory_space<vmem>>, %arg2: memref<8x36xf32, #tpu.memory_space<vmem>>, %arg3: memref<8x1xf32, #tpu.memory_space<vmem>>, %arg4: memref<8x72xf32, #tpu.memory_space<vmem>>, %arg5: memref<8x1xf32, #tpu.memory_space<vmem>>, %arg6: memref<2x256xf32, #tpu.memory_space<vmem>>, %arg7: memref<1x8x256xf32, #tpu.memory_space<vmem>>, %arg8: memref<4x320xf32, #tpu.memory_space<vmem>>, %arg9: memref<8x320xf32, #tpu.memory_space<vmem>>) attributes {dimension_semantics = [#tpu.dimension_semantics<parallel>], iteration_bounds = array<i64: 2>, scalar_prefetch = 0 : i64, scratch_operands = 2 : i64, tpu.core_type = #tpu.core_type<tc>, window_params = [{transform_indices = @transform_0, window_bounds = array<i64: 1, 4, 256>}, {pipeline_mode = #tpu.pipeline_mode<synchronous>, transform_indices = @transform_1, window_bounds = array<i64: 8, 36>}, {pipeline_mode = #tpu.pipeline_mode<synchronous>, transform_indices = @transform_2, window_bounds = array<i64: 8, 1>}, {pipeline_mode = #tpu.pipeline_mode<synchronous>, transform_indices = @transform_3, window_bounds = array<i64: 8, 72>}, {pipeline_mode = #tpu.pipeline_mode<synchronous>, transform_indices = @transform_4, window_bounds = array<i64: 8, 1>}, {pipeline_mode = #tpu.pipeline_mode<synchronous>, transform_indices = @transform_5, window_bounds = array<i64: 2, 256>}, {transform_indices = @transform_6, window_bounds = array<i64: 1, 8, 256>}]} {
    %c0 = arith.constant 0 : index
    %c0_0 = arith.constant 0 : index
    %0 = vector.load %arg6[%c0, %c0_0] : memref<2x256xf32, #tpu.memory_space<vmem>>, vector<2x256xf32>
    %1 = vector.extract_strided_slice %0 {offsets = [0, 0], sizes = [1, 256], strides = [1, 1]} : vector<2x256xf32> to vector<1x256xf32>
    %2 = vector.extract_strided_slice %0 {offsets = [1, 0], sizes = [1, 256], strides = [1, 1]} : vector<2x256xf32> to vector<1x256xf32>
    %cst = arith.constant 0.000000e+00 : f32
    %3 = vector.broadcast %cst : f32 to vector<4x320xf32>
    %c0_1 = arith.constant 0 : index
    %c0_2 = arith.constant 0 : index
    %4 = vector.load %arg8[%c0_1, %c0_2] : memref<4x320xf32, #tpu.memory_space<vmem>>, vector<4x320xf32>
    tpu.vector_store %arg8[%c0_1, %c0_2], %3 {strides = array<i32>} : memref<4x320xf32, #tpu.memory_space<vmem>>, vector<4x320xf32>,
    %c0_3 = arith.constant 0 : index
    %c0_4 = arith.constant 0 : index
    %c0_5 = arith.constant 0 : index
    %5 = vector.load %arg1[%c0_3, %c0_4, %c0_5] : memref<1x4x256xf32, #tpu.memory_space<vmem>>, vector<1x4x256xf32>
    %6 = vector.shape_cast %5 : vector<1x4x256xf32> to vector<4x256xf32>
    %c0_6 = arith.constant 0 : index
    %c32 = arith.constant 32 : index
    %7 = vector.load %arg8[%c0_6, %c32] : memref<4x320xf32, #tpu.memory_space<vmem>>, vector<4x256xf32>
    tpu.vector_store %arg8[%c0_6, %c32], %6 {strides = array<i32>} : memref<4x320xf32, #tpu.memory_space<vmem>>, vector<4x256xf32>,
    %c0_7 = arith.constant 0 : index
    %c0_8 = arith.constant 0 : index
    %8 = vector.load %arg2[%c0_7, %c0_8] : memref<8x36xf32, #tpu.memory_space<vmem>>, vector<8x36xf32>
    %c0_9 = arith.constant 0 : index
    %c0_10 = arith.constant 0 : index
    %9 = vector.load %arg3[%c0_9, %c0_10] : memref<8x1xf32, #tpu.memory_space<vmem>>, vector<8x1xf32>
    %c0_11 = arith.constant 0 : index
    %c15 = arith.constant 15 : index
    %10 = vector.load %arg8[%c0_11, %c15] : memref<4x320xf32, #tpu.memory_space<vmem>>, vector<4x256xf32>
    %11 = vector.broadcast %1 : vector<1x256xf32> to vector<4x256xf32>
    %12 = arith.mulf %10, %11 : vector<4x256xf32>
    %c0_12 = arith.constant 0 : index
    %c16 = arith.constant 16 : index
    %13 = vector.load %arg8[%c0_12, %c16] : memref<4x320xf32, #tpu.memory_space<vmem>>, vector<4x256xf32>
    %c0_13 = arith.constant 0 : index
    %c17 = arith.constant 17 : index
    %14 = vector.load %arg8[%c0_13, %c17] : memref<4x320xf32, #tpu.memory_space<vmem>>, vector<4x256xf32>
    %15 = vector.broadcast %2 : vector<1x256xf32> to vector<4x256xf32>
    %16 = arith.mulf %14, %15 : vector<4x256xf32>
    %c0_14 = arith.constant 0 : index
    %c31 = arith.constant 31 : index
    %17 = vector.load %arg8[%c0_14, %c31] : memref<4x320xf32, #tpu.memory_space<vmem>>, vector<4x256xf32>
    %18 = vector.broadcast %1 : vector<1x256xf32> to vector<4x256xf32>
    %19 = arith.mulf %17, %18 : vector<4x256xf32>
    %c0_15 = arith.constant 0 : index
    %c32_16 = arith.constant 32 : index
    %20 = vector.load %arg8[%c0_15, %c32_16] : memref<4x320xf32, #tpu.memory_space<vmem>>, vector<4x256xf32>
    %c0_17 = arith.constant 0 : index
    %c33 = arith.constant 33 : index
    %21 = vector.load %arg8[%c0_17, %c33] : memref<4x320xf32, #tpu.memory_space<vmem>>, vector<4x256xf32>
    %22 = vector.broadcast %2 : vector<1x256xf32> to vector<4x256xf32>
    %23 = arith.mulf %21, %22 : vector<4x256xf32>
    %c0_18 = arith.constant 0 : index
    %c47 = arith.constant 47 : index
    %24 = vector.load %arg8[%c0_18, %c47] : memref<4x320xf32, #tpu.memory_space<vmem>>, vector<4x256xf32>
    %25 = vector.broadcast %1 : vector<1x256xf32> to vector<4x256xf32>
    %26 = arith.mulf %24, %25 : vector<4x256xf32>
    %c0_19 = arith.constant 0 : index
    %c48 = arith.constant 48 : index
    %27 = vector.load %arg8[%c0_19, %c48] : memref<4x320xf32, #tpu.memory_space<vmem>>, vector<4x256xf32>
    %c0_20 = arith.constant 0 : index
    %c49 = arith.constant 49 : index
    %28 = vector.load %arg8[%c0_20, %c49] : memref<4x320xf32, #tpu.memory_space<vmem>>, vector<4x256xf32>
    %29 = vector.broadcast %2 : vector<1x256xf32> to vector<4x256xf32>
    %30 = arith.mulf %28, %29 : vector<4x256xf32>
    %31 = tpu.concatenate %12, %13, %16, %19, %20, %23, %26, %27, %30 in 0 : vector<4x256xf32>, vector<4x256xf32>, vector<4x256xf32>, vector<4x256xf32>, vector<4x256xf32>, vector<4x256xf32>, vector<4x256xf32>, vector<4x256xf32>, vector<4x256xf32> -> vector<36x256xf32>
    %cst_21 = arith.constant dense<0.000000e+00> : vector<8x256xf32>
    %32 = tpu.matmul %8, %31, %cst_21 {dimension_numbers = #tpu.dot_dimension_numbers<[1], [0], [0], [1], [0, 0, 1, 1], [], []>} : vector<8x36xf32>, vector<36x256xf32>, vector<8x256xf32> -> vector<8x256xf32>
    %33 = vector.broadcast %9 : vector<8x1xf32> to vector<8x256xf32>
    %34 = arith.addf %32, %33 : vector<8x256xf32>
    %cst_22 = arith.constant 0.000000e+00 : f32
    %35 = vector.broadcast %cst_22 : f32 to vector<8x256xf32>
    %36 = arith.maximumf %34, %35 : vector<8x256xf32>
    %cst_23 = arith.constant 0.000000e+00 : f32
    %37 = vector.broadcast %cst_23 : f32 to vector<8x320xf32>
    %c0_24 = arith.constant 0 : index
    %c0_25 = arith.constant 0 : index
    %38 = vector.load %arg9[%c0_24, %c0_25] : memref<8x320xf32, #tpu.memory_space<vmem>>, vector<8x320xf32>
    tpu.vector_store %arg9[%c0_24, %c0_25], %37 {strides = array<i32>} : memref<8x320xf32, #tpu.memory_space<vmem>>, vector<8x320xf32>,
    %c0_26 = arith.constant 0 : index
    %c32_27 = arith.constant 32 : index
    %39 = vector.load %arg9[%c0_26, %c32_27] : memref<8x320xf32, #tpu.memory_space<vmem>>, vector<8x256xf32>
    tpu.vector_store %arg9[%c0_26, %c32_27], %36 {strides = array<i32>} : memref<8x320xf32, #tpu.memory_space<vmem>>, vector<8x256xf32>,
    %c0_28 = arith.constant 0 : index
    %c0_29 = arith.constant 0 : index
    %40 = vector.load %arg4[%c0_28, %c0_29] : memref<8x72xf32, #tpu.memory_space<vmem>>, vector<8x72xf32>
    %c0_30 = arith.constant 0 : index
    %c0_31 = arith.constant 0 : index
    %41 = vector.load %arg5[%c0_30, %c0_31] : memref<8x1xf32, #tpu.memory_space<vmem>>, vector<8x1xf32>
    %c0_32 = arith.constant 0 : index
    %c15_33 = arith.constant 15 : index
    %42 = vector.load %arg9[%c0_32, %c15_33] : memref<8x320xf32, #tpu.memory_space<vmem>>, vector<8x256xf32>
    %43 = vector.broadcast %1 : vector<1x256xf32> to vector<8x256xf32>
    %44 = arith.mulf %42, %43 : vector<8x256xf32>
    %c0_34 = arith.constant 0 : index
    %c16_35 = arith.constant 16 : index
    %45 = vector.load %arg9[%c0_34, %c16_35] : memref<8x320xf32, #tpu.memory_space<vmem>>, vector<8x256xf32>
    %c0_36 = arith.constant 0 : index
    %c17_37 = arith.constant 17 : index
    %46 = vector.load %arg9[%c0_36, %c17_37] : memref<8x320xf32, #tpu.memory_space<vmem>>, vector<8x256xf32>
    %47 = vector.broadcast %2 : vector<1x256xf32> to vector<8x256xf32>
    %48 = arith.mulf %46, %47 : vector<8x256xf32>
    %c0_38 = arith.constant 0 : index
    %c31_39 = arith.constant 31 : index
    %49 = vector.load %arg9[%c0_38, %c31_39] : memref<8x320xf32, #tpu.memory_space<vmem>>, vector<8x256xf32>
    %50 = vector.broadcast %1 : vector<1x256xf32> to vector<8x256xf32>
    %51 = arith.mulf %49, %50 : vector<8x256xf32>
    %c0_40 = arith.constant 0 : index
    %c32_41 = arith.constant 32 : index
    %52 = vector.load %arg9[%c0_40, %c32_41] : memref<8x320xf32, #tpu.memory_space<vmem>>, vector<8x256xf32>
    %c0_42 = arith.constant 0 : index
    %c33_43 = arith.constant 33 : index
    %53 = vector.load %arg9[%c0_42, %c33_43] : memref<8x320xf32, #tpu.memory_space<vmem>>, vector<8x256xf32>
    %54 = vector.broadcast %2 : vector<1x256xf32> to vector<8x256xf32>
    %55 = arith.mulf %53, %54 : vector<8x256xf32>
    %c0_44 = arith.constant 0 : index
    %c47_45 = arith.constant 47 : index
    %56 = vector.load %arg9[%c0_44, %c47_45] : memref<8x320xf32, #tpu.memory_space<vmem>>, vector<8x256xf32>
    %57 = vector.broadcast %1 : vector<1x256xf32> to vector<8x256xf32>
    %58 = arith.mulf %56, %57 : vector<8x256xf32>
    %c0_46 = arith.constant 0 : index
    %c48_47 = arith.constant 48 : index
    %59 = vector.load %arg9[%c0_46, %c48_47] : memref<8x320xf32, #tpu.memory_space<vmem>>, vector<8x256xf32>
    %c0_48 = arith.constant 0 : index
    %c49_49 = arith.constant 49 : index
    %60 = vector.load %arg9[%c0_48, %c49_49] : memref<8x320xf32, #tpu.memory_space<vmem>>, vector<8x256xf32>
    %61 = vector.broadcast %2 : vector<1x256xf32> to vector<8x256xf32>
    %62 = arith.mulf %60, %61 : vector<8x256xf32>
    %63 = tpu.concatenate %44, %45, %48, %51, %52, %55, %58, %59, %62 in 0 : vector<8x256xf32>, vector<8x256xf32>, vector<8x256xf32>, vector<8x256xf32>, vector<8x256xf32>, vector<8x256xf32>, vector<8x256xf32>, vector<8x256xf32>, vector<8x256xf32> -> vector<72x256xf32>
    %cst_50 = arith.constant dense<0.000000e+00> : vector<8x256xf32>
    %64 = tpu.matmul %40, %63, %cst_50 {dimension_numbers = #tpu.dot_dimension_numbers<[1], [0], [0], [1], [0, 0, 1, 1], [], []>} : vector<8x72xf32>, vector<72x256xf32>, vector<8x256xf32> -> vector<8x256xf32>
    %65 = vector.broadcast %41 : vector<8x1xf32> to vector<8x256xf32>
    %66 = arith.addf %64, %65 : vector<8x256xf32>
    %cst_51 = arith.constant 0.000000e+00 : f32
    %67 = vector.broadcast %cst_51 : f32 to vector<8x256xf32>
    %68 = arith.maximumf %66, %67 : vector<8x256xf32>
    %c0_52 = arith.constant 0 : index
    %c0_53 = arith.constant 0 : index
    %c0_54 = arith.constant 0 : index
    %69 = vector.load %arg7[%c0_52, %c0_53, %c0_54] : memref<1x8x256xf32, #tpu.memory_space<vmem>>, vector<1x8x256xf32>
    %70 = vector.shape_cast %69 : vector<1x8x256xf32> to vector<8x256xf32>
    %71 = vector.shape_cast %68 : vector<8x256xf32> to vector<1x8x256xf32>
    tpu.vector_store %arg7[%c0_52, %c0_53, %c0_54], %71 {strides = array<i32>} : memref<1x8x256xf32, #tpu.memory_space<vmem>>, vector<1x8x256xf32>,
    return
  }
  func.func @transform_0(%arg0: i32) -> (i32, i32, i32) {
    %c0_i32 = arith.constant 0 : i32
    %c0_i32_0 = arith.constant 0 : i32
    %c0_i32_1 = arith.constant 0 : i32
    return %arg0, %c0_i32, %c0_i32_0 : i32, i32, i32
  }
  func.func @transform_1(%arg0: i32) -> (i32, i32) {
    %c0_i32 = arith.constant 0 : i32
    %c0_i32_0 = arith.constant 0 : i32
    %c0_i32_1 = arith.constant 0 : i32
    return %c0_i32, %c0_i32_0 : i32, i32
  }
  func.func @transform_2(%arg0: i32) -> (i32, i32) {
    %c0_i32 = arith.constant 0 : i32
    %c0_i32_0 = arith.constant 0 : i32
    %c0_i32_1 = arith.constant 0 : i32
    return %c0_i32, %c0_i32_0 : i32, i32
  }
  func.func @transform_3(%arg0: i32) -> (i32, i32) {
    %c0_i32 = arith.constant 0 : i32
    %c0_i32_0 = arith.constant 0 : i32
    %c0_i32_1 = arith.constant 0 : i32
    return %c0_i32, %c0_i32_0 : i32, i32
  }
  func.func @transform_4(%arg0: i32) -> (i32, i32) {
    %c0_i32 = arith.constant 0 : i32
    %c0_i32_0 = arith.constant 0 : i32
    %c0_i32_1 = arith.constant 0 : i32
    return %c0_i32, %c0_i32_0 : i32, i32
  }
  func.func @transform_5(%arg0: i32) -> (i32, i32) {
    %c0_i32 = arith.constant 0 : i32
    %c0_i32_0 = arith.constant 0 : i32
    %c0_i32_1 = arith.constant 0 : i32
    return %c0_i32, %c0_i32_0 : i32, i32
  }
  func.func @transform_6(%arg0: i32) -> (i32, i32, i32) {
    %c0_i32 = arith.constant 0 : i32
    %c0_i32_0 = arith.constant 0 : i32
    %c0_i32_1 = arith.constant 0 : i32
    return %arg0, %c0_i32, %c0_i32_0 : i32, i32, i32
  }
}

</mosaic_0001>

<llo_original>
// kernel: unet_block_apply.1
$region0: #{unet_block_apply.1}
  #allocation0 [shape = 'u32[]', space=smem, size = 0x4, offset = 0x4, fixed_abs, tag = 'smem constant byte address 0x4 - core index']
  #allocation1 [shape = 'u32[144,128]{1,0:T(1,128)}', space=vmem, size = 0x12000, scoped, tag = 'internal scratch']
  #allocation2 [shape = 'f32[4,320]{1,0:T(4,128)}', space=vmem, size = 0x1800, scoped, tag = 'scratch operand']
  #allocation3 [shape = 'f32[8,320]{1,0:T(8,128)}', space=vmem, size = 0x3000, scoped, tag = 'scratch operand']
  %s0 = inlined_call_operand.vmem [shape: f32[2,4,256], index: 0, kind: input, shape index: {}]
  %s1 = inlined_call_operand.vmem [shape: f32[8,36], index: 1, kind: input, shape index: {}]
  %s2 = inlined_call_operand.vmem [shape: f32[8,1], index: 2, kind: input, shape index: {}]
  %s3 = inlined_call_operand.vmem [shape: f32[8,72], index: 3, kind: input, shape index: {}]
  %s4 = inlined_call_operand.vmem [shape: f32[8,1], index: 4, kind: input, shape index: {}]
  %s5 = inlined_call_operand.vmem [shape: f32[2,256], index: 5, kind: input, shape index: {}]
  %s6 = inlined_call_operand.vmem [shape: f32[2,8,256], index: 6, kind: output, shape index: {}]
  %s7 = sld [smem:[#allocation0]]
  $region57: #{unet_block_apply.1} parent=0
    _
  %s9 = ssub.s32 1, %s7
  %s10 = scalar_select 0, %s9, %s7
  loop: start=0, step=1, limit=4
  $region2: #{unet_block_apply.1} parent=0 // loop_pre_header
    _
  $region3: #{unet_block_apply.1} parent=0 // loop_header
    %s12 = sphi 0, %s16
    %p13 = scmp.ge.s32.totalorder %s12, 4
    %s22 = sphi 0, %s24
    %s25 = sphi 0, %s22
    %s26 = sphi 0, %s25
    %s42 = sphi 0, %s26
    %s46 = sphi 0, %s46
    %s48 = sphi 0, %s46
    %s49 = sphi 0, %s48
    %s63 = sphi 0, %s49
    %s67 = sphi 0, %s67
    %s69 = sphi 0, %s67
    %s70 = sphi 0, %s69
    %s84 = sphi 0, %s70
    %s88 = sphi 0, %s88
    %s90 = sphi 0, %s88
    %s91 = sphi 0, %s90
    %s105 = sphi 0, %s91
    %s109 = sphi 0, %s109
    %s111 = sphi 0, %s109
    %s112 = sphi 0, %s111
    %s126 = sphi 0, %s112
    %s130 = sphi 0, %s130
    %s132 = sphi 0, %s130
    %s133 = sphi 0, %s132
    %s147 = sphi 0, %s133
    %s153 = sphi 0, %s155
    %s156 = sphi 0, %s153
    %s157 = sphi 0, %s156
    %s173 = sphi 0, %s157
  $region4: #{unet_block_apply.1} parent=0 // loop_header_branch
    %15 = sbr.rel (%p13) target = $region8
  $region5: #{unet_block_apply.1} parent=0 // loop_body
    %s17 = ssub.s32 %s12, 1
    %s18 = ssub.s32 %s12, 2
    %s19 = sadd.s32 %s12, 1
    %s20 = ssub.s32 %s12, %s19
    %p21 = scmp.eq.s32.totalorder %s20, 0
    %s23 = sadd.s32 %s22, 1
    %s24 = scalar_select %p21, %s22, %s23
    %p27 = pneg %p21
    %p28 = scmp.eq.s32.totalorder %s12, 1
    %p29 = por %p27, %p28
    %p30 = scmp.ne.s32.totalorder %s22, %s25
    %p31 = scmp.eq.s32.totalorder %s12, 0
    %p32 = por %p30, %p31
    %p33 = scmp.ne.s32.totalorder %s22, %s25
    %p34 = scmp.eq.s32.totalorder %s17, 1
    %p35 = por %p33, %p34
    %p36 = scmp.ne.s32.totalorder %s25, %s26
    %p37 = scmp.eq.s32.totalorder %s17, 0
    %p38 = por %p36, %p37
    %p39 = scmp.ne.s32.totalorder %s25, %s26
    %p40 = scmp.eq.s32.totalorder %s18, 1
    %p41 = por %p39, %p40
    %p43 = scmp.ne.s32.totalorder %s26, %s42
    %p44 = scmp.eq.s32.totalorder %s18, 0
    %p45 = por %p43, %p44
    %s47 = sadd.s32 %s46, 1
    %p50 = scmp.eq.s32.totalorder %s12, 1
    %p51 = scmp.ne.s32.totalorder %s46, %s48
    %p52 = scmp.eq.s32.totalorder %s12, 0
    %p53 = por %p51, %p52
    %p54 = scmp.ne.s32.totalorder %s46, %s48
    %p55 = scmp.eq.s32.totalorder %s17, 1
    %p56 = por %p54, %p55
    %p57 = scmp.ne.s32.totalorder %s48, %s49
    %p58 = scmp.eq.s32.totalorder %s17, 0
    %p59 = por %p57, %p58
    %p60 = scmp.ne.s32.totalorder %s48, %s49
    %p61 = scmp.eq.s32.totalorder %s18, 1
    %p62 = por %p60, %p61
    %p64 = scmp.ne.s32.totalorder %s49, %s63
    %p65 = scmp.eq.s32.totalorder %s18, 0
    %p66 = por %p64, %p65
    %s68 = sadd.s32 %s67, 1
    %p71 = scmp.eq.s32.totalorder %s12, 1
    %p72 = scmp.ne.s32.totalorder %s67, %s69
    %p73 = scmp.eq.s32.totalorder %s12, 0
    %p74 = por %p72, %p73
    %p75 = scmp.ne.s32.totalorder %s67, %s69
    %p76 = scmp.eq.s32.totalorder %s17, 1
    %p77 = por %p75, %p76
    %p78 = scmp.ne.s32.totalorder %s69, %s70
    %p79 = scmp.eq.s32.totalorder %s17, 0
    %p80 = por %p78, %p79
    %p81 = scmp.ne.s32.totalorder %s69, %s70
    %p82 = scmp.eq.s32.totalorder %s18, 1
    %p83 = por %p81, %p82
    %p85 = scmp.ne.s32.totalorder %s70, %s84
    %p86 = scmp.eq.s32.totalorder %s18, 0
    %p87 = por %p85, %p86
    %s89 = sadd.s32 %s88, 1
    %p92 = scmp.eq.s32.totalorder %s12, 1
    %p93 = scmp.ne.s32.totalorder %s88, %s90
    %p94 = scmp.eq.s32.totalorder %s12, 0
    %p95 = por %p93, %p94
    %p96 = scmp.ne.s32.totalorder %s88, %s90
    %p97 = scmp.eq.s32.totalorder %s17, 1
    %p98 = por %p96, %p97
    %p99 = scmp.ne.s32.totalorder %s90, %s91
    %p100 = scmp.eq.s32.totalorder %s17, 0
    %p101 = por %p99, %p100
    %p102 = scmp.ne.s32.totalorder %s90, %s91
    %p103 = scmp.eq.s32.totalorder %s18, 1
    %p104 = por %p102, %p103
    %p106 = scmp.ne.s32.totalorder %s91, %s105
    %p107 = scmp.eq.s32.totalorder %s18, 0
    %p108 = por %p106, %p107
    %s110 = sadd.s32 %s109, 1
    %p113 = scmp.eq.s32.totalorder %s12, 1
    %p114 = scmp.ne.s32.totalorder %s109, %s111
    %p115 = scmp.eq.s32.totalorder %s12, 0
    %p116 = por %p114, %p115
    %p117 = scmp.ne.s32.totalorder %s109, %s111
    %p118 = scmp.eq.s32.totalorder %s17, 1
    %p119 = por %p117, %p118
    %p120 = scmp.ne.s32.totalorder %s111, %s112
    %p121 = scmp.eq.s32.totalorder %s17, 0
    %p122 = por %p120, %p121
    %p123 = scmp.ne.s32.totalorder %s111, %s112
    %p124 = scmp.eq.s32.totalorder %s18, 1
    %p125 = por %p123, %p124
    %p127 = scmp.ne.s32.totalorder %s112, %s126
    %p128 = scmp.eq.s32.totalorder %s18, 0
    %p129 = por %p127, %p128
    %s131 = sadd.s32 %s130, 1
    %p134 = scmp.eq.s32.totalorder %s12, 1
    %p135 = scmp.ne.s32.totalorder %s130, %s132
    %p136 = scmp.eq.s32.totalorder %s12, 0
    %p137 = por %p135, %p136
    %p138 = scmp.ne.s32.totalorder %s130, %s132
    %p139 = scmp.eq.s32.totalorder %s17, 1
    %p140 = por %p138, %p139
    %p141 = scmp.ne.s32.totalorder %s132, %s133
    %p142 = scmp.eq.s32.totalorder %s17, 0
    %p143 = por %p141, %p142
    %p144 = scmp.ne.s32.totalorder %s132, %s133
    %p145 = scmp.eq.s32.totalorder %s18, 1
    %p146 = por %p144, %p145
    %p148 = scmp.ne.s32.totalorder %s133, %s147
    %p149 = scmp.eq.s32.totalorder %s18, 0
    %p150 = por %p148, %p149
    %s151 = ssub.s32 %s12, %s19
    %p152 = scmp.eq.s32.totalorder %s151, 0
    %s154 = sadd.s32 %s153, 1
    %s155 = scalar_select %p152, %s153, %s154
    %p158 = pneg %p152
    %p159 = scmp.eq.s32.totalorder %s12, 1
    %p160 = por %p158, %p159
    %p161 = scmp.ne.s32.totalorder %s153, %s156
    %p162 = scmp.eq.s32.totalorder %s12, 0
    %p163 = por %p161, %p162
    %p164 = scmp.ne.s32.totalorder %s153, %s156
    %p165 = scmp.eq.s32.totalorder %s17, 1
    %p166 = por %p164, %p165
    %p167 = scmp.ne.s32.totalorder %s156, %s157
    %p168 = scmp.eq.s32.totalorder %s17, 0
    %p169 = por %p167, %p168
    %p170 = scmp.ne.s32.totalorder %s156, %s157
    %p171 = scmp.eq.s32.totalorder %s18, 1
    %p172 = por %p170, %p171
    %p174 = scmp.ne.s32.totalorder %s157, %s173
    %p175 = scmp.eq.s32.totalorder %s18, 0
    %p176 = por %p174, %p175
    %p177 = scmp.le.s32.totalorder 1, %s12
    %p178 = scmp.lt.s32.totalorder %s12, 3
    %p179 = pnand %p177, %p178
    %p180 = pneg %p179
    // Predicated region
    $region9: #{unet_block_apply.1} parent=5 // pred_check
      _
    $region10: #{unet_block_apply.1} parent=5 // pred_check_branch
      %182 = sbr.rel (%p179) target = $region12
    $region11: #{unet_block_apply.1} parent=5 // pred_region
      %s183 = ssub.s32 %s12, 1
      // Predicated region
      $region13: #{unet_block_apply.1} parent=11 // pred_check
        %p184 = pneg %p59
      $region14: #{unet_block_apply.1} parent=11 // pred_check_branch
        %186 = sbr.rel (%p184) target = $region16
      $region15: #{unet_block_apply.1} parent=11 // pred_region
        _
      $region16: #{unet_block_apply.1} parent=11 // pred_fallthru
        _
      // Predicated region
      $region17: #{unet_block_apply.1} parent=11 // pred_check
        %p187 = pneg %p80
      $region18: #{unet_block_apply.1} parent=11 // pred_check_branch
        %189 = sbr.rel (%p187) target = $region20
      $region19: #{unet_block_apply.1} parent=11 // pred_region
        _
      $region20: #{unet_block_apply.1} parent=11 // pred_fallthru
        _
      // Predicated region
      $region21: #{unet_block_apply.1} parent=11 // pred_check
        %p190 = pneg %p101
      $region22: #{unet_block_apply.1} parent=11 // pred_check_branch
        %192 = sbr.rel (%p190) target = $region24
      $region23: #{unet_block_apply.1} parent=11 // pred_region
        _
      $region24: #{unet_block_apply.1} parent=11 // pred_fallthru
        _
      // Predicated region
      $region25: #{unet_block_apply.1} parent=11 // pred_check
        %p193 = pneg %p122
      $region26: #{unet_block_apply.1} parent=11 // pred_check_branch
        %195 = sbr.rel (%p193) target = $region28
      $region27: #{unet_block_apply.1} parent=11 // pred_region
        _
      $region28: #{unet_block_apply.1} parent=11 // pred_fallthru
        _
      // Predicated region
      $region29: #{unet_block_apply.1} parent=11 // pred_check
        %p196 = pneg %p143
      $region30: #{unet_block_apply.1} parent=11 // pred_check_branch
        %198 = sbr.rel (%p196) target = $region32
      $region31: #{unet_block_apply.1} parent=11 // pred_region
        _
      $region32: #{unet_block_apply.1} parent=11 // pred_fallthru
        _
    $region12: #{unet_block_apply.1} parent=5 // pred_fallthru
      _
    %p199 = scmp.lt.s32.totalorder %s12, 2
    // Predicated region
    $region33: #{unet_block_apply.1} parent=5 // pred_check
      %p200 = pneg %p199
    $region34: #{unet_block_apply.1} parent=5 // pred_check_branch
      %202 = sbr.rel (%p200) target = $region36
    $region35: #{unet_block_apply.1} parent=5 // pred_region
      // Predicated region
      $region37: #{unet_block_apply.1} parent=35 // pred_check
        %p203 = pneg %p32
      $region38: #{unet_block_apply.1} parent=35 // pred_check_branch
        %205 = sbr.rel (%p203) target = $region40
      $region39: #{unet_block_apply.1} parent=35 // pred_region
        %p206 = scmp.lt.s32.totalorder %s12, 1
        %s207 = scalar_select %p206, %s12, 1
        %s208 = smul.addr %s207, 2
        %s209 = smul.addr %s208, 4
        %s210 = scalar_lea.vmem %s0, %s209
      $region40: #{unet_block_apply.1} parent=35 // pred_fallthru
        _
    $region36: #{unet_block_apply.1} parent=5 // pred_fallthru
      _
    %p211 = scmp.le.s32.totalorder 1, %s12
    %p212 = scmp.lt.s32.totalorder %s12, 3
    %p213 = pnand %p211, %p212
    %p214 = pneg %p213
    // Predicated region
    $region41: #{unet_block_apply.1} parent=5 // pred_check
      _
    $region42: #{unet_block_apply.1} parent=5 // pred_check_branch
      %216 = sbr.rel (%p213) target = $region44
    $region43: #{unet_block_apply.1} parent=5 // pred_region
      %s217 = ssub.s32 %s12, 1
      %p218 = scmp.lt.s32.totalorder %s17, 1
      %s219 = scalar_select %p218, %s17, 1
      %s220 = smul.addr %s219, 2
      %s221 = smul.addr %s220, 4
      %s222 = scalar_lea.vmem %s0, %s221
      %p223 = pneg %p38
      %p224 = pneg %p35
      %p225 = pneg %p59
      %p226 = pneg %p56
      %p227 = pneg %p80
      %p228 = pneg %p77
      %p229 = pneg %p101
      %p230 = pneg %p98
      %p231 = pneg %p122
      %p232 = pneg %p119
      %p233 = pneg %p143
      %p234 = pneg %p140
      %p235 = pneg %p169
      %p236 = pneg %p166
      %p237 = scmp.lt.s32.totalorder %s17, 1
      %s238 = scalar_select %p237, %s17, 1
      %s239 = smul.addr %s238, 2
      %s240 = smul.addr %s239, 8
      %s241 = scalar_lea.vmem %s6, %s240
      %p242 = scmp.lt.s32.totalorder %s17, 1
      %s243 = scalar_select %p242, %s17, 1
      %s244 = smul.addr %s243, 2
      %s245 = smul.addr %s244, 4
      %s246 = scalar_lea.vmem %s0, %s245
      %p247 = scmp.lt.s32.totalorder %s17, 1
      %s248 = scalar_select %p247, %s17, 1
      %s249 = smul.addr %s248, 2
      %s250 = smul.addr %s249, 8
      %s251 = scalar_lea.vmem %s6, %s250
      %v252 = vld [vmem:[%s5] sm:$0xf]
      %253 = vst [vmem:[#allocation2] sm:$0xff] 0.0
      %vm254 = vcmask 519168
      %255 = vst.msk [vmem:[#allocation2 + $0x8] sm:$0xf] %vm254, 0.0
      %v256 = vld [vmem:[%s246] sm:$0xff]
      %258 = vrot.lane.b32.xlu0 %v256, 32
      %v259 = vpop.permute.xlu0 %258
      %v260 = vrot.slane %v259, 4
      %vm261 = vcmask 261120
      %v262 = vsel %vm261, %v260, %v259
      %vm265 = vcmask 1043712
      %vm266 = vcmask 1047556
      %vm267 = vmor %vm266, %vm265
      %268 = vst.msk [vmem:[#allocation2] sm:$0xff] %vm267, %v262
      %vm269 = vcmask 257024
      %270 = vst.msk [vmem:[#allocation2 + $0x8] sm:$0xf] %vm269, %v260
      %v271 = vld [vmem:[%s1] sm:$0xff]
      %v272 = vld [vmem:[%s2] sm:$0xff]
      %v273 = vld [vmem:[#allocation2] sm:$0xff]
      %v274 = vld [vmem:[#allocation2 + $0x8] sm:$0xf]
      %v276 = vlaneseq
      %v277 = vshrl.u32 %v276, 7
      %v278 = vsub.s32 0, %v277
      %v279 = vrot.slane %v252, %v278
      %v280 = vlaneseq
      %v281 = vshrl.u32 %v280, 7
      %v282 = vsub.s32 2, %v281
      %v283 = vrot.slane %v252, %v282
      %v286 = vlaneseq
      %v287 = vshrl.u32 %v286, 7
      %v288 = vsub.s32 0, %v287
      %v289 = vrot.slane %v279, %v288
      %v290 = vlaneseq
      %v291 = vshrl.u32 %v290, 7
      %v292 = vsub.s32 0, %v291
      %v293 = vrot.slane %v283, %v292
      %v296 = vcombine.low %v289, %v293
      %297 = vrot.lane.b32.xlu0 %v296, 15
      %v298 = vpop.permute.xlu0 %297
      %v299 = vrot.slane %v298, 4
      %vm300 = vcmask 121856
      %v301 = vsel %vm300, %v299, %v298
      %v304 = vmul.f32 %v273, %v301
      %v305 = vmul.f32 %v274, %v299
      %v306 = vlaneseq
      %v307 = vshrl.u32 %v306, 7
      %v308 = vsub.s32 1, %v307
      %v309 = vrot.slane %v252, %v308
      %v310 = vlaneseq
      %v311 = vshrl.u32 %v310, 7
      %v312 = vsub.s32 3, %v311
      %v313 = vrot.slane %v252, %v312
      %v316 = vlaneseq
      %v317 = vshrl.u32 %v316, 7
      %v318 = vsub.s32 1, %v317
      %v319 = vrot.slane %v309, %v318
      %v320 = vlaneseq
      %v321 = vshrl.u32 %v320, 7
      %v322 = vsub.s32 1, %v321
      %v323 = vrot.slane %v313, %v322
      %v326 = vcombine.low %v319, %v323
      %327 = vrot.lane.b32.xlu0 %v326, 17
      %v328 = vpop.permute.xlu0 %327
      %v329 = vrot.slane %v328, 4
      %vm330 = vcmask 138240
      %v331 = vsel %vm330, %v329, %v328
      %v334 = vmul.f32 %v273, %v331
      %v335 = vmul.f32 %v274, %v329
      %336 = vrot.lane.b32.xlu0 %v296, 31
      %v337 = vpop.permute.xlu0 %336
      %v338 = vrot.slane %v337, 4
      %vm339 = vcmask 252928
      %v340 = vsel %vm339, %v338, %v337
      %v343 = vmul.f32 %v273, %v340
      %v344 = vmul.f32 %v274, %v338
      %345 = vrot.lane.b32.xlu0 %v326, 33
      %v346 = vpop.permute.xlu0 %345
      %v347 = vrot.slane %v346, 4
      %vm348 = vcmask 269312
      %v349 = vsel %vm348, %v347, %v346
      %v352 = vmul.f32 %v273, %v349
      %v353 = vmul.f32 %v274, %v347
      %354 = vrot.lane.b32.xlu0 %v296, 47
      %v355 = vpop.permute.xlu0 %354
      %v356 = vrot.slane %v355, 4
      %vm357 = vcmask 384000
      %v358 = vsel %vm357, %v356, %v355
      %v361 = vmul.f32 %v273, %v358
      %v362 = vmul.f32 %v274, %v356
      %363 = vrot.lane.b32.xlu0 %v326, 49
      %v364 = vpop.permute.xlu0 %363
      %v365 = vrot.slane %v364, 4
      %vm366 = vcmask 400384
      %v367 = vsel %vm366, %v365, %v364
      %v370 = vmul.f32 %v273, %v367
      %v371 = vmul.f32 %v274, %v365
      %v373 = vcombine.high %v304, %v304
      %v377 = vcombine.low %v273, %v273
      %v378 = vcombine.low %v274, %v274
      %379 = vrot.lane.b32.xlu0 %v377, 127
      %v380 = vpop.permute.xlu0 %379
      %381 = vrot.lane.b32.xlu0 %v273, 127
      %v382 = vpop.permute.xlu0 %381
      %383 = vrot.lane.b32.xlu0 %v378, 127
      %v384 = vpop.permute.xlu0 %383
      %vm385 = vcmask 1039360
      %v386 = vsel %vm385, %v380, %v382
      %v387 = vsel %vm385, %v382, %v384
      %v393 = vcombine.high %v334, %v334
      %394 = vrot.lane.b32.xlu0 %v334, 126
      %v395 = vpop.permute.xlu0 %394
      %396 = vrot.lane.b32.xlu0 %v393, 126
      %v397 = vpop.permute.xlu0 %396
      %398 = vrot.lane.b32.xlu0 %v335, 126
      %v399 = vpop.permute.xlu0 %398
      %vm400 = vcmask 1031168
      %v401 = vsel %vm400, %v395, %v397
      %v402 = vsel %vm400, %v397, %v399
      %v408 = vcombine.low %v343, %v343
      %v409 = vcombine.low %v344, %v344
      %410 = vrot.lane.b32.xlu0 %v408, 112
      %v411 = vpop.permute.xlu0 %410
      %412 = vrot.lane.b32.xlu0 %v343, 112
      %v413 = vpop.permute.xlu0 %412
      %414 = vrot.lane.b32.xlu0 %v409, 112
      %v415 = vpop.permute.xlu0 %414
      %vm416 = vcmask 916480
      %v417 = vsel %vm416, %v411, %v413
      %v418 = vsel %vm416, %v413, %v415
      %v422 = vcombine.high %v273, %v273
      %423 = vrot.lane.b32.xlu0 %v273, 111
      %v424 = vpop.permute.xlu0 %423
      %425 = vrot.lane.b32.xlu0 %v422, 111
      %v426 = vpop.permute.xlu0 %425
      %427 = vrot.lane.b32.xlu0 %v274, 111
      %v428 = vpop.permute.xlu0 %427
      %vm429 = vcmask 908288
      %v430 = vsel %vm429, %v424, %v426
      %v431 = vsel %vm429, %v426, %v428
      %v437 = vcombine.low %v352, %v352
      %v438 = vcombine.low %v353, %v353
      %439 = vrot.lane.b32.xlu0 %v437, 110
      %v440 = vpop.permute.xlu0 %439
      %441 = vrot.lane.b32.xlu0 %v352, 110
      %v442 = vpop.permute.xlu0 %441
      %443 = vrot.lane.b32.xlu0 %v438, 110
      %v444 = vpop.permute.xlu0 %443
      %vm445 = vcmask 900096
      %v446 = vsel %vm445, %v440, %v442
      %v447 = vsel %vm445, %v442, %v444
      %v453 = vcombine.high %v361, %v361
      %454 = vrot.lane.b32.xlu0 %v361, 96
      %v455 = vpop.permute.xlu0 %454
      %456 = vrot.lane.b32.xlu0 %v453, 96
      %v457 = vpop.permute.xlu0 %456
      %458 = vrot.lane.b32.xlu0 %v362, 96
      %v459 = vpop.permute.xlu0 %458
      %vm460 = vcmask 785408
      %v461 = vsel %vm460, %v455, %v457
      %v462 = vsel %vm460, %v457, %v459
      %466 = vrot.lane.b32.xlu0 %v377, 95
      %v467 = vpop.permute.xlu0 %466
      %468 = vrot.lane.b32.xlu0 %v273, 95
      %v469 = vpop.permute.xlu0 %468
      %470 = vrot.lane.b32.xlu0 %v378, 95
      %v471 = vpop.permute.xlu0 %470
      %vm472 = vcmask 777216
      %v473 = vsel %vm472, %v467, %v469
      %v474 = vsel %vm472, %v469, %v471
      %v480 = vcombine.high %v370, %v370
      %481 = vrot.lane.b32.xlu0 %v370, 94
      %v482 = vpop.permute.xlu0 %481
      %483 = vrot.lane.b32.xlu0 %v480, 94
      %v484 = vpop.permute.xlu0 %483
      %485 = vrot.lane.b32.xlu0 %v371, 94
      %v486 = vpop.permute.xlu0 %485
      %vm487 = vcmask 769024
      %v488 = vsel %vm487, %v482, %v484
      %v489 = vsel %vm487, %v484, %v486
      %vm490 = vcmask 1043456
      %v491 = vsel %vm490, %v304, %v386
      %v492 = vsel %vm490, %v373, %v387
      %v493 = vsel %vm490, %v305, %v384
      %v494 = vsel %vm490, %v401, %v417
      %v495 = vsel %vm490, %v402, %v418
      %v496 = vsel %vm490, %v399, %v415
      %v497 = vsel %vm490, %v430, %v446
      %v498 = vsel %vm490, %v431, %v447
      %v499 = vsel %vm490, %v428, %v444
      %v500 = vsel %vm490, %v461, %v473
      %v501 = vsel %vm490, %v462, %v474
      %v502 = vsel %vm490, %v459, %v471
      %504 = vset.pattern.permute.xlu0 0
      %505 = vperm.xlu0 %504, %v272
      %v506 = vpop.permute.xlu0 %505
      %520 = vrot.lane.b32.xlu0 %v491, 113
      %v521 = vpop.permute.xlu0 %520
      %522 = vrot.lane.b32.xlu0 %v492, 113
      %v523 = vpop.permute.xlu0 %522
      %524 = vrot.lane.b32.xlu0 %v493, 113
      %v525 = vpop.permute.xlu0 %524
      %526 = vrot.lane.b32.xlu0 %v494, 113
      %v527 = vpop.permute.xlu0 %526
      %528 = vrot.lane.b32.xlu0 %v495, 113
      %v529 = vpop.permute.xlu0 %528
      %530 = vrot.lane.b32.xlu0 %v496, 113
      %v531 = vpop.permute.xlu0 %530
      %532 = vrot.lane.b32.xlu0 %v497, 113
      %v533 = vpop.permute.xlu0 %532
      %534 = vrot.lane.b32.xlu0 %v498, 113
      %v535 = vpop.permute.xlu0 %534
      %536 = vrot.lane.b32.xlu0 %v499, 113
      %v537 = vpop.permute.xlu0 %536
      %538 = vrot.lane.b32.xlu0 %v500, 113
      %v539 = vpop.permute.xlu0 %538
      %540 = vrot.lane.b32.xlu0 %v501, 113
      %v541 = vpop.permute.xlu0 %540
      %542 = vrot.lane.b32.xlu0 %v502, 113
      %v543 = vpop.permute.xlu0 %542
      %544 = vrot.lane.b32.xlu0 %v488, 113
      %v545 = vpop.permute.xlu0 %544
      %546 = vrot.lane.b32.xlu0 %v489, 113
      %v547 = vpop.permute.xlu0 %546
      %548 = vrot.lane.b32.xlu0 %v486, 113
      %v549 = vpop.permute.xlu0 %548
      %vm550 = vcmask 924672
      %v551 = vsel %vm550, %v521, %v523
      %v552 = vsel %vm550, %v523, %v525
      %v553 = vsel %vm550, %v527, %v529
      %v554 = vsel %vm550, %v529, %v531
      %v555 = vsel %vm550, %v533, %v535
      %v556 = vsel %vm550, %v535, %v537
      %v557 = vsel %vm550, %v539, %v541
      %v558 = vsel %vm550, %v541, %v543
      %v559 = vsel %vm550, %v545, %v547
      %v560 = vsel %vm550, %v547, %v549
      %vm569 = vcmask 293888
      %v571 = vsel %vm569, %v271, 0
      %v573 = vsel %vm490, %v559, 0
      %v575 = vsel %vm490, %v560, 0
      %577 = vmatprep.subr.mxu0 %v552
      %578 = vmatpush1.msra.mxu0 %v551
      %579 = vmatprep.subr.mxu0 %v554
      %580 = vmatpush1.msra.mxu0 %v553
      %581 = vmatprep.subr.mxu0 %v556
      %582 = vmatpush1.msra.mxu0 %v555
      %583 = vmatprep.subr.mxu0 %v558
      %584 = vmatpush1.msra.mxu0 %v557
      %585 = vmatprep.subr.mxu0 %v575
      %586 = vmatpush1.msra.mxu0 %v573
      %587 = vmatprep.subr.mxu0 0.0
      %588 = vmatpush1.msra.mxu0 0.0
      %589 = vmatprep.subr.mxu0 0.0
      %590 = vmatpush1.msra.mxu0 0.0
      %591 = vmatprep.subr.mxu0 0.0
      %592 = vmatpush1.msra.mxu0 0.0
      %593 = vmatprep.subr.mxu0 0.0
      %594 = vmatpush1.msra.mxu0 0.0
      %595 = vmatprep.subr.mxu0 0.0
      %596 = vmatpush1.msra.mxu0 0.0
      %597 = vmatprep.subr.mxu0 0.0
      %598 = vmatpush1.msra.mxu0 0.0
      %599 = vmatprep.subr.mxu0 0.0
      %600 = vmatpush1.msra.mxu0 0.0
      %601 = vmatprep.subr.mxu0 0.0
      %602 = vmatpush1.msra.mxu0 0.0
      %603 = vmatprep.subr.mxu0 0.0
      %604 = vmatpush1.msra.mxu0 0.0
      %605 = vmatprep.subr.mxu0 0.0
      %606 = vmatpush1.msra.mxu0 0.0
      %607 = vmatprep.subr.mxu0 0.0
      %608 = vmatpush1.msra.mxu0 0.0
      %609 = vmatprep.subr.mxu0 0.0
      %610 = vmatpush1.msra.mxu0 0.0
      %611 = vmatprep.subr.mxu0 0.0
      %612 = vmatpush1.msra.mxu0 0.0
      %613 = vmatprep.subr.mxu0 0.0
      %614 = vmatpush1.msra.mxu0 0.0
      %615 = vmatprep.subr.mxu0 0.0
      %616 = vmatpush1.msra.mxu0 0.0
      %617 = vmatprep.subr.mxu0 0.0
      %618 = vmatpush1.msra.mxu0 0.0
      %619 = vmatprep.subr.mxu0 0.0
      %620 = vmatpush1.msra.mxu0 0.0
      %621 = vmatprep.subr.mxu0 0.0
      %622 = vmatpush1.msra.mxu0 0.0
      %623 = vmatprep.subr.mxu0 0.0
      %624 = vmatpush1.msra.mxu0 0.0
      %625 = vmatprep.subr.mxu0 0.0
      %626 = vmatpush1.msra.mxu0 0.0
      %627 = vmatprep.subr.mxu0 0.0
      %628 = vmatpush1.msra.mxu0 0.0
      %629 = vmatprep.subr.mxu0 0.0
      %630 = vmatpush1.msra.mxu0 0.0
      %631 = vmatprep.subr.mxu0 0.0
      %632 = vmatpush1.msra.mxu0 0.0
      %633 = vmatprep.subr.mxu0 0.0
      %634 = vmatpush1.msra.mxu0 0.0
      %635 = vmatprep.subr.mxu0 0.0
      %636 = vmatpush1.msra.mxu0 0.0
      %637 = vmatprep.subr.mxu0 0.0
      %638 = vmatpush1.msra.mxu0 0.0
      %639 = vmatprep.subr.mxu0 0.0
      %640 = vmatpush1.msra.mxu0 0.0
      %641 = vmatprep.mubr.f32.mxu0 0.0
      %642 = vmatmul.mubr.f32.gmra.mrb[0].mxu0 %v571
      %v643 = vpop.f32.mrb[0].mxu0
      %v644 = vadd.f32 %v506, %v643
      %v645 = vpop.f32.mrb[0].mxu0
      %v646 = vadd.f32 %v506, %v645
      %647 = vdwg.mxu0
      %v648 = vmax.f32 %v644, 0.0
      %v649 = vmax.f32 %v646, 0.0
      %650 = vst [vmem:[#allocation3] sm:$0xff] 0.0
      %651 = vst [vmem:[#allocation3 + $0x8] sm:$0xff] 0.0
      %vm652 = vcmask 523264
      %653 = vst.msk [vmem:[#allocation3 + $0x10] sm:$0xff] %vm652, 0.0
      %656 = vrot.lane.b32.xlu0 %v648, 32
      %v657 = vpop.permute.xlu0 %656
      %658 = vrot.lane.b32.xlu0 %v649, 32
      %v659 = vpop.permute.xlu0 %658
      %v660 = vsel %vm261, %v657, %v659
      %vm664 = vcmask 1047808
      %665 = vst.msk [vmem:[#allocation3] sm:$0xff] %vm664, %v657
      %666 = vst [vmem:[#allocation3 + $0x8] sm:$0xff] %v660
      %667 = vst.msk [vmem:[#allocation3 + $0x10] sm:$0xff] %vm261, %v659
      %v668 = vld [vmem:[%s3] sm:$0xff]
      %v669 = vld [vmem:[%s4] sm:$0xff]
      %v670 = vld [vmem:[#allocation3] sm:$0xff]
      %v671 = vld [vmem:[#allocation3 + $0x8] sm:$0xff]
      %v672 = vld [vmem:[#allocation3 + $0x10] sm:$0xff]
      %673 = vrot.lane.b32.xlu0 %v289, 15
      %v674 = vpop.permute.xlu0 %673
      %675 = vrot.lane.b32.xlu0 %v293, 15
      %v676 = vpop.permute.xlu0 %675
      %v677 = vsel %vm300, %v674, %v676
      %v681 = vmul.f32 %v670, %v674
      %v682 = vmul.f32 %v671, %v677
      %v683 = vmul.f32 %v672, %v676
      %684 = vrot.lane.b32.xlu0 %v319, 17
      %v685 = vpop.permute.xlu0 %684
      %686 = vrot.lane.b32.xlu0 %v323, 17
      %v687 = vpop.permute.xlu0 %686
      %v688 = vsel %vm330, %v685, %v687
      %v692 = vmul.f32 %v670, %v685
      %v693 = vmul.f32 %v671, %v688
      %v694 = vmul.f32 %v672, %v687
      %695 = vrot.lane.b32.xlu0 %v289, 31
      %v696 = vpop.permute.xlu0 %695
      %697 = vrot.lane.b32.xlu0 %v293, 31
      %v698 = vpop.permute.xlu0 %697
      %v699 = vsel %vm339, %v696, %v698
      %v703 = vmul.f32 %v670, %v696
      %v704 = vmul.f32 %v671, %v699
      %v705 = vmul.f32 %v672, %v698
      %706 = vrot.lane.b32.xlu0 %v319, 33
      %v707 = vpop.permute.xlu0 %706
      %708 = vrot.lane.b32.xlu0 %v323, 33
      %v709 = vpop.permute.xlu0 %708
      %v710 = vsel %vm348, %v707, %v709
      %v714 = vmul.f32 %v670, %v707
      %v715 = vmul.f32 %v671, %v710
      %v716 = vmul.f32 %v672, %v709
      %717 = vrot.lane.b32.xlu0 %v289, 47
      %v718 = vpop.permute.xlu0 %717
      %719 = vrot.lane.b32.xlu0 %v293, 47
      %v720 = vpop.permute.xlu0 %719
      %v721 = vsel %vm357, %v718, %v720
      %v725 = vmul.f32 %v670, %v718
      %v726 = vmul.f32 %v671, %v721
      %v727 = vmul.f32 %v672, %v720
      %728 = vrot.lane.b32.xlu0 %v319, 49
      %v729 = vpop.permute.xlu0 %728
      %730 = vrot.lane.b32.xlu0 %v323, 49
      %v731 = vpop.permute.xlu0 %730
      %v732 = vsel %vm366, %v729, %v731
      %v736 = vmul.f32 %v670, %v729
      %v737 = vmul.f32 %v671, %v732
      %v738 = vmul.f32 %v672, %v731
      %742 = vrot.lane.b32.xlu0 %v670, 127
      %v743 = vpop.permute.xlu0 %742
      %744 = vrot.lane.b32.xlu0 %v671, 127
      %v745 = vpop.permute.xlu0 %744
      %746 = vrot.lane.b32.xlu0 %v672, 127
      %v747 = vpop.permute.xlu0 %746
      %v748 = vsel %vm385, %v743, %v745
      %v749 = vsel %vm385, %v745, %v747
      %753 = vrot.lane.b32.xlu0 %v692, 126
      %v754 = vpop.permute.xlu0 %753
      %755 = vrot.lane.b32.xlu0 %v693, 126
      %v756 = vpop.permute.xlu0 %755
      %757 = vrot.lane.b32.xlu0 %v694, 126
      %v758 = vpop.permute.xlu0 %757
      %v759 = vsel %vm400, %v754, %v756
      %v760 = vsel %vm400, %v756, %v758
      %764 = vrot.lane.b32.xlu0 %v703, 112
      %v765 = vpop.permute.xlu0 %764
      %766 = vrot.lane.b32.xlu0 %v704, 112
      %v767 = vpop.permute.xlu0 %766
      %768 = vrot.lane.b32.xlu0 %v705, 112
      %v769 = vpop.permute.xlu0 %768
      %v770 = vsel %vm416, %v765, %v767
      %v771 = vsel %vm416, %v767, %v769
      %772 = vrot.lane.b32.xlu0 %v670, 111
      %v773 = vpop.permute.xlu0 %772
      %774 = vrot.lane.b32.xlu0 %v671, 111
      %v775 = vpop.permute.xlu0 %774
      %776 = vrot.lane.b32.xlu0 %v672, 111
      %v777 = vpop.permute.xlu0 %776
      %v778 = vsel %vm429, %v773, %v775
      %v779 = vsel %vm429, %v775, %v777
      %783 = vrot.lane.b32.xlu0 %v714, 110
      %v784 = vpop.permute.xlu0 %783
      %785 = vrot.lane.b32.xlu0 %v715, 110
      %v786 = vpop.permute.xlu0 %785
      %787 = vrot.lane.b32.xlu0 %v716, 110
      %v788 = vpop.permute.xlu0 %787
      %v789 = vsel %vm445, %v784, %v786
      %v790 = vsel %vm445, %v786, %v788
      %794 = vrot.lane.b32.xlu0 %v725, 96
      %v795 = vpop.permute.xlu0 %794
      %796 = vrot.lane.b32.xlu0 %v726, 96
      %v797 = vpop.permute.xlu0 %796
      %798 = vrot.lane.b32.xlu0 %v727, 96
      %v799 = vpop.permute.xlu0 %798
      %v800 = vsel %vm460, %v795, %v797
      %v801 = vsel %vm460, %v797, %v799
      %802 = vrot.lane.b32.xlu0 %v670, 95
      %v803 = vpop.permute.xlu0 %802
      %804 = vrot.lane.b32.xlu0 %v671, 95
      %v805 = vpop.permute.xlu0 %804
      %806 = vrot.lane.b32.xlu0 %v672, 95
      %v807 = vpop.permute.xlu0 %806
      %v808 = vsel %vm472, %v803, %v805
      %v809 = vsel %vm472, %v805, %v807
      %813 = vrot.lane.b32.xlu0 %v736, 94
      %v814 = vpop.permute.xlu0 %813
      %815 = vrot.lane.b32.xlu0 %v737, 94
      %v816 = vpop.permute.xlu0 %815
      %817 = vrot.lane.b32.xlu0 %v738, 94
      %v818 = vpop.permute.xlu0 %817
      %v819 = vsel %vm487, %v814, %v816
      %v820 = vsel %vm487, %v816, %v818
      %822 = vset.pattern.permute.xlu0 0
      %823 = vperm.xlu0 %822, %v669
      %v824 = vpop.permute.xlu0 %823
      %829 = vrot.lane.b32.xlu0 %v681, 113
      %v830 = vpop.permute.xlu0 %829
      %831 = vrot.lane.b32.xlu0 %v682, 113
      %v832 = vpop.permute.xlu0 %831
      %833 = vrot.lane.b32.xlu0 %v683, 113
      %v834 = vpop.permute.xlu0 %833
      %835 = vrot.lane.b32.xlu0 %v748, 113
      %v836 = vpop.permute.xlu0 %835
      %837 = vrot.lane.b32.xlu0 %v749, 113
      %v838 = vpop.permute.xlu0 %837
      %839 = vrot.lane.b32.xlu0 %v747, 113
      %v840 = vpop.permute.xlu0 %839
      %841 = vrot.lane.b32.xlu0 %v759, 113
      %v842 = vpop.permute.xlu0 %841
      %843 = vrot.lane.b32.xlu0 %v760, 113
      %v844 = vpop.permute.xlu0 %843
      %845 = vrot.lane.b32.xlu0 %v758, 113
      %v846 = vpop.permute.xlu0 %845
      %847 = vrot.lane.b32.xlu0 %v770, 113
      %v848 = vpop.permute.xlu0 %847
      %849 = vrot.lane.b32.xlu0 %v771, 113
      %v850 = vpop.permute.xlu0 %849
      %851 = vrot.lane.b32.xlu0 %v769, 113
      %v852 = vpop.permute.xlu0 %851
      %853 = vrot.lane.b32.xlu0 %v778, 113
      %v854 = vpop.permute.xlu0 %853
      %855 = vrot.lane.b32.xlu0 %v779, 113
      %v856 = vpop.permute.xlu0 %855
      %857 = vrot.lane.b32.xlu0 %v777, 113
      %v858 = vpop.permute.xlu0 %857
      %859 = vrot.lane.b32.xlu0 %v789, 113
      %v860 = vpop.permute.xlu0 %859
      %861 = vrot.lane.b32.xlu0 %v790, 113
      %v862 = vpop.permute.xlu0 %861
      %863 = vrot.lane.b32.xlu0 %v788, 113
      %v864 = vpop.permute.xlu0 %863
      %865 = vrot.lane.b32.xlu0 %v800, 113
      %v866 = vpop.permute.xlu0 %865
      %867 = vrot.lane.b32.xlu0 %v801, 113
      %v868 = vpop.permute.xlu0 %867
      %869 = vrot.lane.b32.xlu0 %v799, 113
      %v870 = vpop.permute.xlu0 %869
      %871 = vrot.lane.b32.xlu0 %v808, 113
      %v872 = vpop.permute.xlu0 %871
      %873 = vrot.lane.b32.xlu0 %v809, 113
      %v874 = vpop.permute.xlu0 %873
      %875 = vrot.lane.b32.xlu0 %v807, 113
      %v876 = vpop.permute.xlu0 %875
      %877 = vrot.lane.b32.xlu0 %v819, 113
      %v878 = vpop.permute.xlu0 %877
      %879 = vrot.lane.b32.xlu0 %v820, 113
      %v880 = vpop.permute.xlu0 %879
      %881 = vrot.lane.b32.xlu0 %v818, 113
      %v882 = vpop.permute.xlu0 %881
      %v883 = vsel %vm550, %v830, %v832
      %v884 = vsel %vm550, %v832, %v834
      %v885 = vsel %vm550, %v836, %v838
      %v886 = vsel %vm550, %v838, %v840
      %v887 = vsel %vm550, %v842, %v844
      %v888 = vsel %vm550, %v844, %v846
      %v889 = vsel %vm550, %v848, %v850
      %v890 = vsel %vm550, %v850, %v852
      %v891 = vsel %vm550, %v854, %v856
      %v892 = vsel %vm550, %v856, %v858
      %v893 = vsel %vm550, %v860, %v862
      %v894 = vsel %vm550, %v862, %v864
      %v895 = vsel %vm550, %v866, %v868
      %v896 = vsel %vm550, %v868, %v870
      %v897 = vsel %vm550, %v872, %v874
      %v898 = vsel %vm550, %v874, %v876
      %v899 = vsel %vm550, %v878, %v880
      %v900 = vsel %vm550, %v880, %v882
      %vm919 = vcmask 588800
      %v921 = vsel %vm919, %v668, 0
      %923 = vmatprep.subr.mxu0 %v884
      %924 = vmatpush1.msra.mxu0 %v883
      %925 = vmatprep.subr.mxu0 %v886
      %926 = vmatpush1.msra.mxu0 %v885
      %927 = vmatprep.subr.mxu0 %v888
      %928 = vmatpush1.msra.mxu0 %v887
      %929 = vmatprep.subr.mxu0 %v890
      %930 = vmatpush1.msra.mxu0 %v889
      %931 = vmatprep.subr.mxu0 %v892
      %932 = vmatpush1.msra.mxu0 %v891
      %933 = vmatprep.subr.mxu0 %v894
      %934 = vmatpush1.msra.mxu0 %v893
      %935 = vmatprep.subr.mxu0 %v896
      %936 = vmatpush1.msra.mxu0 %v895
      %937 = vmatprep.subr.mxu0 %v898
      %938 = vmatpush1.msra.mxu0 %v897
      %939 = vmatprep.subr.mxu0 %v900
      %940 = vmatpush1.msra.mxu0 %v899
      %941 = vmatprep.subr.mxu0 0.0
      %942 = vmatpush1.msra.mxu0 0.0
      %943 = vmatprep.subr.mxu0 0.0
      %944 = vmatpush1.msra.mxu0 0.0
      %945 = vmatprep.subr.mxu0 0.0
      %946 = vmatpush1.msra.mxu0 0.0
      %947 = vmatprep.subr.mxu0 0.0
      %948 = vmatpush1.msra.mxu0 0.0
      %949 = vmatprep.subr.mxu0 0.0
      %950 = vmatpush1.msra.mxu0 0.0
      %951 = vmatprep.subr.mxu0 0.0
      %952 = vmatpush1.msra.mxu0 0.0
      %953 = vmatprep.subr.mxu0 0.0
      %954 = vmatpush1.msra.mxu0 0.0
      %955 = vmatprep.subr.mxu0 0.0
      %956 = vmatpush1.msra.mxu0 0.0
      %957 = vmatprep.subr.mxu0 0.0
      %958 = vmatpush1.msra.mxu0 0.0
      %959 = vmatprep.subr.mxu0 0.0
      %960 = vmatpush1.msra.mxu0 0.0
      %961 = vmatprep.subr.mxu0 0.0
      %962 = vmatpush1.msra.mxu0 0.0
      %963 = vmatprep.subr.mxu0 0.0
      %964 = vmatpush1.msra.mxu0 0.0
      %965 = vmatprep.subr.mxu0 0.0
      %966 = vmatpush1.msra.mxu0 0.0
      %967 = vmatprep.subr.mxu0 0.0
      %968 = vmatpush1.msra.mxu0 0.0
      %969 = vmatprep.subr.mxu0 0.0
      %970 = vmatpush1.msra.mxu0 0.0
      %971 = vmatprep.subr.mxu0 0.0
      %972 = vmatpush1.msra.mxu0 0.0
      %973 = vmatprep.subr.mxu0 0.0
      %974 = vmatpush1.msra.mxu0 0.0
      %975 = vmatprep.subr.mxu0 0.0
      %976 = vmatpush1.msra.mxu0 0.0
      %977 = vmatprep.subr.mxu0 0.0
      %978 = vmatpush1.msra.mxu0 0.0
      %979 = vmatprep.subr.mxu0 0.0
      %980 = vmatpush1.msra.mxu0 0.0
      %981 = vmatprep.subr.mxu0 0.0
      %982 = vmatpush1.msra.mxu0 0.0
      %983 = vmatprep.subr.mxu0 0.0
      %984 = vmatpush1.msra.mxu0 0.0
      %985 = vmatprep.subr.mxu0 0.0
      %986 = vmatpush1.msra.mxu0 0.0
      %987 = vmatprep.mubr.f32.mxu0 0.0
      %988 = vmatmul.mubr.f32.gmra.mrb[0].mxu0 %v921
      %v989 = vpop.f32.mrb[0].mxu0
      %v990 = vadd.f32 %v824, %v989
      %v991 = vpop.f32.mrb[0].mxu0
      %v992 = vadd.f32 %v824, %v991
      %993 = vdwg.mxu0
      %v994 = vmax.f32 %v990, 0.0
      %v995 = vmax.f32 %v992, 0.0
      %996 = vst [vmem:[%s251] sm:$0xff] %v994
      %997 = vst [vmem:[%s251 + $0x8] sm:$0xff] %v995
      %p998 = scmp.lt.s32.totalorder %s17, 1
      %s999 = scalar_select %p998, %s17, 1
      %s1000 = smul.addr %s999, 2
      %s1001 = smul.addr %s1000, 8
      %s1002 = scalar_lea.vmem %s6, %s1001
      // Predicated region
      $region45: #{unet_block_apply.1} parent=43 // pred_check
        %p1003 = pneg %p166
      $region46: #{unet_block_apply.1} parent=43 // pred_check_branch
        %1005 = sbr.rel (%p1003) target = $region48
      $region47: #{unet_block_apply.1} parent=43 // pred_region
        _
      $region48: #{unet_block_apply.1} parent=43 // pred_fallthru
        _
    $region44: #{unet_block_apply.1} parent=5 // pred_fallthru
      _
    %p1006 = scmp.le.s32.totalorder 2, %s12
    // Predicated region
    $region49: #{unet_block_apply.1} parent=5 // pred_check
      %p1007 = pneg %p1006
    $region50: #{unet_block_apply.1} parent=5 // pred_check_branch
      %1009 = sbr.rel (%p1007) target = $region52
    $region51: #{unet_block_apply.1} parent=5 // pred_region
      %s1010 = ssub.s32 %s12, 2
      // Predicated region
      $region53: #{unet_block_apply.1} parent=51 // pred_check
        %p1011 = pneg %p172
      $region54: #{unet_block_apply.1} parent=51 // pred_check_branch
        %1013 = sbr.rel (%p1011) target = $region56
      $region55: #{unet_block_apply.1} parent=51 // pred_region
        %p1014 = scmp.lt.s32.totalorder %s18, 1
        %s1015 = scalar_select %p1014, %s18, 1
        %s1016 = smul.addr %s1015, 2
        %s1017 = smul.addr %s1016, 8
        %s1018 = scalar_lea.vmem %s6, %s1017
      $region56: #{unet_block_apply.1} parent=51 // pred_fallthru
        _
    $region52: #{unet_block_apply.1} parent=5 // pred_fallthru
      _
  $region6: #{unet_block_apply.1} parent=0 // loop_footer
    %s16 = sadd.s32 1, %s12
  $region7: #{unet_block_apply.1} parent=0 // loop_footer_branch
    %11 = sbr.rel target = $region3
  $region8: #{unet_block_apply.1} parent=0 // loop_exit
    _

</llo_original>
